<compile_context>
chip_gen: v7x
topology: tpu7x:2x2x1
jax: 0.10.0
libtpu: 0.0.40
codegen_flags: <defaults>
</compile_context>

<pallas_src>
import functools

import jax
import jax.numpy as jnp
from jax.experimental import pallas as pl
from jax.experimental.pallas import tpu as pltpu


LANES = 128
SUBLANES = 8
MAX_BLOCK_ROWS = 1024   # (1024,128) f32 tile = 512 KiB; 2 inputs x 3 bufs ~ 3 MiB


def _cdiv(a, b):
    return -(-a // b)


def _focal_weight(one_minus_pt, gamma):
    """(1 - pt) ** gamma, specialised at trace time for the actual gamma."""
    if gamma == 0.0:
        return jnp.ones_like(one_minus_pt)
    if gamma == 0.5:
        return jnp.sqrt(one_minus_pt)
    if gamma == 1.0:
        return one_minus_pt
    if float(gamma).is_integer() and 1.0 < gamma <= 4.0:
        w = one_minus_pt
        for _ in range(int(gamma) - 1):
            w = w * one_minus_pt
        return w
    # Generic fallback: guard base==0 so exp(gamma*log(0)) cannot produce NaN.
    return jnp.where(one_minus_pt > 0.0,
                     jnp.power(jnp.maximum(one_minus_pt, 1e-38), gamma),
                     jnp.zeros_like(one_minus_pt))


def _focal_loss_kernel(x_ref, t_ref, o_ref, acc_ref, *,
                       gamma, block_rows, blocks_per_split, n_total):
    c = pl.program_id(0)          # megacore split (parallel)
    i = pl.program_id(1)          # row-block within the split (arbitrary)

    @pl.when(i == 0)
    def _():
        acc_ref[...] = jnp.zeros_like(acc_ref)

    x = x_ref[...].astype(jnp.float32)
    t = t_ref[...].astype(jnp.float32)

    # One exp per element, shared by the stable BCE and the sigmoid:
    #   bce = max(x, 0) - x*t + log(1 + exp(-|x|))   (== BCEWithLogitsLoss)
    e = jnp.exp(-jnp.abs(x))
    bce = jnp.maximum(x, 0.0) - x * t + jnp.log1p(e)
    # r = 1/(1+e); sigmoid(x) = r for x>=0 else 1-r, hence
    #   1 - pt = (1-r) when (x>=0) == (t==1) else r   (single select, no
    # `probs` intermediate).  Exact `t == 1` compare matches the PyTorch spec
    # (torch.where(targets == 1, ...)); soft targets are out of spec.
    r = 1.0 / (1.0 + e)
    one_minus_pt = jnp.where((x >= 0.0) == (t == 1.0), 1.0 - r, r)
    focal = _focal_weight(one_minus_pt, gamma) * bce

    block_elems = block_rows * LANES
    logical_blk = c * blocks_per_split + i          # UNclamped block index
    block_start = logical_blk * block_elems

    n_groups = block_rows // SUBLANES
    rem = block_rows - n_groups * SUBLANES

    def accumulate(vals):
        # Sublane-block fold into a single (8,128) accumulator: the leading-
        # axis reshape is tile-aligned (no relayout), so this is pure VPU adds.
        if n_groups > 0:
            acc_ref[...] += jnp.sum(
                vals[:n_groups * SUBLANES].reshape(n_groups, SUBLANES, LANES),
                axis=0)
        if rem:
            acc_ref[0:rem, :] += vals[n_groups * SUBLANES:, :]

    interior = block_start + block_elems <= n_total

    @pl.when(interior)                     # hot path: zero masking work
    def _():
        accumulate(focal)

    @pl.when(jnp.logical_not(interior))    # boundary / overhang block only
    def _():
        row = jax.lax.broadcasted_iota(jnp.int32, (block_rows, LANES), 0)
        lane = jax.lax.broadcasted_iota(jnp.int32, (block_rows, LANES), 1)
        idx = block_start + row * LANES + lane
        # Select (not multiply) so garbage/NaN from OOB lanes cannot leak.
        accumulate(jnp.where(idx < n_total, focal, 0.0))

    @pl.when(i == pl.num_programs(1) - 1)
    def _():
        o_ref[...] = acc_ref[...]


def cyclical_focal_loss(inputs, targets, *, gamma_list, epoch=0,
                        reduction="mean", max_block_rows=MAX_BLOCK_ROWS):
    """Pallas TPU implementation of CyclicalFocalLoss.forward."""
    gamma = float(gamma_list[epoch % len(gamma_list)])

    # Keep storage dtype (e.g. bf16) in HBM; the kernel upcasts to f32 on-chip.
    x = jnp.asarray(inputs).reshape(-1)
    t = jnp.asarray(targets).reshape(-1)
    n = x.shape[0]

    rows = _cdiv(n, LANES)
    lane_padded = rows * LANES
    if lane_padded != n:
        # Pad only to the 128-lane boundary (copy only when n % 128 != 0);
        # the padded lanes are masked out inside the kernel.
        x = jnp.pad(x, (0, lane_padded - n))
        t = jnp.pad(t, (0, lane_padded - n))
    x2 = x.reshape(rows, LANES)
    t2 = t.reshape(rows, LANES)

    if rows <= max_block_rows:
        block_rows, num_blocks = rows, 1           # block == full array dim
    else:
        block_rows = max_block_rows                # multiple of 32 (packing)
        num_blocks = _cdiv(rows, block_rows)       # last block may be partial

    # Always split the block range across 2 TensorCores when there is more
    # than one block (v7x megacore; sequential no-op on v5e/v6e).  Odd block
    # counts: clamp the DMA index; the overhang block is fully masked via its
    # unclamped logical index in the kernel, so it contributes exactly 0.
    num_splits = 2 if num_blocks >= 2 else 1
    blocks_per_split = _cdiv(num_blocks, num_splits)
    last_block = num_blocks - 1

    def in_map(c, i):
        return (jnp.minimum(c * blocks_per_split + i, last_block), 0)

    pipeline_mode = pl.Buffered(3) if blocks_per_split >= 3 else None
    in_spec = pl.BlockSpec((block_rows, LANES), in_map,
                           pipeline_mode=pipeline_mode)

    kernel = functools.partial(_focal_loss_kernel, gamma=gamma,
                               block_rows=block_rows,
                               blocks_per_split=blocks_per_split,
                               n_total=n)

    partials = pl.pallas_call(
        kernel,
        out_shape=jax.ShapeDtypeStruct((num_splits * SUBLANES, LANES),
                                       jnp.float32),
        grid_spec=pltpu.PrefetchScalarGridSpec(
            num_scalar_prefetch=0,
            grid=(num_splits, blocks_per_split),
            in_specs=[in_spec, in_spec],
            out_specs=pl.BlockSpec((SUBLANES, LANES), lambda c, i: (c, 0)),
            scratch_shapes=[pltpu.VMEM((SUBLANES, LANES), jnp.float32)],
        ),
        compiler_params=pltpu.CompilerParams(
            dimension_semantics=("parallel", "arbitrary"),
            vmem_limit_bytes=24 * 1024 * 1024),
    )(x2, t2)

    # Tiny final reduce ((num_splits*8,128) -> scalar) left to XLA.
    total = jnp.sum(partials)
    if reduction == "mean":
        return total / jnp.float32(n)
    return total


def _reference(inputs, targets, *, gamma_list, epoch=0, reduction="mean"):
    gamma = float(gamma_list[epoch % len(gamma_list)])
    x = jnp.asarray(inputs).astype(jnp.float32)
    t = jnp.asarray(targets).astype(jnp.float32)
    bce = jnp.maximum(x, 0.0) - x * t + jnp.log1p(jnp.exp(-jnp.abs(x)))
    probs = jax.nn.sigmoid(x)
    pt = jnp.where(t == 1.0, probs, 1.0 - probs)
    focal = jnp.power(1.0 - pt, gamma) * bce
    return jnp.mean(focal) if reduction == "mean" else jnp.sum(focal)


if __name__ == "__main__":
    key = jax.random.PRNGKey(0)
    k1, k2, k3, k4, k5, k6, k7, k8 = jax.random.split(key, 8)

    gamma_list = [2.0, 1.0, 0.5]

    # Case 1: NCHW f32 logits, gamma=2 (epoch 0), mean, single block, no pad.
    x1 = jax.random.normal(k1, (2, 4, 16, 16), dtype=jnp.float32)
    t1 = (jax.random.uniform(k2, (2, 4, 16, 16)) > 0.5).astype(jnp.float32)
    out1 = jax.block_until_ready(
        cyclical_focal_loss(x1, t1, gamma_list=gamma_list, epoch=0,
                            reduction="mean"))
    ref1 = _reference(x1, t1, gamma_list=gamma_list, epoch=0, reduction="mean")
    assert jnp.allclose(out1, ref1, rtol=1e-4, atol=1e-6), (out1, ref1)

    # Case 2: odd-sized bf16 logits, gamma=0.5 (epoch 2), sum — exercises the
    # 128-lane pad + in-kernel mask and the narrow-storage-dtype path.
    x2 = jax.random.normal(k3, (3, 5, 7), dtype=jnp.float32).astype(jnp.bfloat16)
    t2 = (jax.random.uniform(k4, (3, 5, 7)) > 0.5).astype(jnp.float32)
    out2 = jax.block_until_ready(
        cyclical_focal_loss(x2, t2, gamma_list=gamma_list, epoch=2,
                            reduction="sum"))
    ref2 = _reference(x2, t2, gamma_list=gamma_list, epoch=2, reduction="sum")
    assert jnp.allclose(out2, ref2, rtol=1e-4, atol=1e-6), (out2, ref2)

    # Case 3: larger tensor hitting the 2-way (megacore) block split with two
    # full interior blocks, gamma=1 (epoch 1), mean.
    x3 = jax.random.normal(k5, (4, 64, 32, 32), dtype=jnp.float32)
    t3 = (jax.random.uniform(k6, (4, 64, 32, 32)) > 0.5).astype(jnp.float32)
    out3 = jax.block_until_ready(
        cyclical_focal_loss(x3, t3, gamma_list=gamma_list, epoch=1,
                            reduction="mean"))
    ref3 = _reference(x3, t3, gamma_list=gamma_list, epoch=1, reduction="mean")
    assert jnp.allclose(out3, ref3, rtol=1e-4, atol=1e-6), (out3, ref3)

    # Case 4: small max_block_rows forces an ODD block count (5), a partial
    # final block, an overhang (fully masked) block on split 1, Buffered(3)
    # input pipelining, and a non-multiple-of-128 element count.
    x4 = jax.random.normal(k7, (3, 5, 1000), dtype=jnp.float32)
    t4 = (jax.random.uniform(k8, (3, 5, 1000)) > 0.5).astype(jnp.float32)
    out4 = jax.block_until_ready(
        cyclical_focal_loss(x4, t4, gamma_list=gamma_list, epoch=3,
                            reduction="mean", max_block_rows=24))
    ref4 = _reference(x4, t4, gamma_list=gamma_list, epoch=3, reduction="mean")
    assert jnp.allclose(out4, ref4, rtol=1e-4, atol=1e-6), (out4, ref4)

    # Case 4b: same data, default block size -> single (118,128) block with a
    # non-multiple-of-8 row count (exercises the remainder-fold path).
    out4b = jax.block_until_ready(
        cyclical_focal_loss(x4, t4, gamma_list=gamma_list, epoch=3,
                            reduction="sum"))
    ref4b = _reference(x4, t4, gamma_list=gamma_list, epoch=3, reduction="sum")
    assert jnp.allclose(out4b, ref4b, rtol=1e-4, atol=1e-6), (out4b, ref4b)

    print("KERNEL_OK")
</pallas_src>

<mosaic_0001>
module attributes {stable_mosaic.version = 11 : i64} {
  func.func @_focal_loss_kernel(%arg0: i32, %arg1: i32, %arg2: memref<16x128xf32, #tpu.memory_space<vmem>>, %arg3: memref<16x128xf32, #tpu.memory_space<vmem>>, %arg4: memref<8x128xf32, #tpu.memory_space<vmem>>, %arg5: memref<8x128xf32, #tpu.memory_space<vmem>>) attributes {dimension_semantics = [#tpu.dimension_semantics<parallel>, #tpu.dimension_semantics<arbitrary>], iteration_bounds = array<i64: 1, 1>, scalar_prefetch = 0 : i64, scratch_operands = 1 : i64, tpu.core_type = #tpu.core_type<tc>, window_params = [{transform_indices = @transform_0, window_bounds = array<i64: 16, 128>}, {transform_indices = @transform_1, window_bounds = array<i64: 16, 128>}, {transform_indices = @transform_2, window_bounds = array<i64: 8, 128>}]} {
    %c0_i32 = arith.constant 0 : i32
    %0 = arith.cmpi eq, %arg1, %c0_i32 : i32
    %1 = arith.extui %0 : i1 to i32
    %c0_i32_0 = arith.constant 0 : i32
    %2 = arith.cmpi ne, %1, %c0_i32_0 : i32
    scf.if %2 {
      %cst_17 = arith.constant 0.000000e+00 : f32
      %43 = vector.broadcast %cst_17 : f32 to vector<8x128xf32>
      %c0_18 = arith.constant 0 : index
      %c0_19 = arith.constant 0 : index
      %44 = vector.load %arg5[%c0_18, %c0_19] : memref<8x128xf32, #tpu.memory_space<vmem>>, vector<8x128xf32>
      tpu.vector_store %arg5[%c0_18, %c0_19], %43 {strides = array<i32>} : memref<8x128xf32, #tpu.memory_space<vmem>>, vector<8x128xf32>,
    } else {
    }
    %c0 = arith.constant 0 : index
    %c0_1 = arith.constant 0 : index
    %3 = vector.load %arg2[%c0, %c0_1] : memref<16x128xf32, #tpu.memory_space<vmem>>, vector<16x128xf32>
    %c0_2 = arith.constant 0 : index
    %c0_3 = arith.constant 0 : index
    %4 = vector.load %arg3[%c0_2, %c0_3] : memref<16x128xf32, #tpu.memory_space<vmem>>, vector<16x128xf32>
    %5 = math.absf %3 : vector<16x128xf32>
    %cst = arith.constant 0.000000e+00 : f32
    %6 = vector.broadcast %cst : f32 to vector<16x128xf32>
    %7 = arith.subf %6, %5 : vector<16x128xf32>
    %8 = math.exp %7 : vector<16x128xf32>
    %cst_4 = arith.constant 0.000000e+00 : f32
    %9 = vector.broadcast %cst_4 : f32 to vector<16x128xf32>
    %10 = arith.maximumf %3, %9 : vector<16x128xf32>
    %11 = arith.mulf %3, %4 : vector<16x128xf32>
    %12 = arith.subf %10, %11 : vector<16x128xf32>
    %13 = math.log1p %8 : vector<16x128xf32>
    %14 = arith.addf %12, %13 : vector<16x128xf32>
    %cst_5 = arith.constant 1.000000e+00 : f32
    %15 = vector.broadcast %cst_5 : f32 to vector<16x128xf32>
    %16 = arith.addf %15, %8 : vector<16x128xf32>
    %cst_6 = arith.constant 1.000000e+00 : f32
    %17 = vector.broadcast %cst_6 : f32 to vector<16x128xf32>
    %18 = arith.divf %17, %16 : vector<16x128xf32>
    %cst_7 = arith.constant 0.000000e+00 : f32
    %19 = vector.broadcast %cst_7 : f32 to vector<16x128xf32>
    %20 = arith.cmpf oge, %3, %19 : vector<16x128xf32>
    %cst_8 = arith.constant 1.000000e+00 : f32
    %21 = vector.broadcast %cst_8 : f32 to vector<16x128xf32>
    %22 = arith.cmpf oeq, %4, %21 : vector<16x128xf32>
    %23 = arith.xori %20, %22 : vector<16x128xi1>
    %cst_9 = arith.constant dense<true> : vector<16x128xi1>
    %24 = arith.xori %23, %cst_9 : vector<16x128xi1>
    %cst_10 = arith.constant 1.000000e+00 : f32
    %25 = vector.broadcast %cst_10 : f32 to vector<16x128xf32>
    %26 = arith.subf %25, %18 : vector<16x128xf32>
    %27 = arith.select %24, %26, %18 : vector<16x128xi1>, vector<16x128xf32>
    %28 = arith.mulf %27, %27 : vector<16x128xf32>
    %29 = arith.mulf %28, %14 : vector<16x128xf32>
    %c1_i32 = arith.constant 1 : i32
    %30 = arith.muli %arg0, %c1_i32 : i32
    %31 = arith.addi %30, %arg1 : i32
    %c2048_i32 = arith.constant 2048 : i32
    %32 = arith.muli %31, %c2048_i32 : i32
    %c2048_i32_11 = arith.constant 2048 : i32
    %33 = arith.addi %32, %c2048_i32_11 : i32
    %c2048_i32_12 = arith.constant 2048 : i32
    %34 = arith.cmpi sle, %33, %c2048_i32_12 : i32
    %35 = arith.extui %34 : i1 to i32
    %c0_i32_13 = arith.constant 0 : i32
    %36 = arith.cmpi ne, %35, %c0_i32_13 : i32
    scf.if %36 {
      %c0_17 = arith.constant 0 : index
      %c0_18 = arith.constant 0 : index
      %43 = vector.load %arg5[%c0_17, %c0_18] : memref<8x128xf32, #tpu.memory_space<vmem>>, vector<8x128xf32>
      %44 = vector.shape_cast %29 : vector<16x128xf32> to vector<2x8x128xf32>
      %cst_19 = arith.constant dense<0.000000e+00> : vector<8x128xf32>
      %45 = vector.multi_reduction <add>, %44, %cst_19 [0] : vector<2x8x128xf32> to vector<8x128xf32>
      %46 = arith.addf %43, %45 : vector<8x128xf32>
      %c0_20 = arith.constant 0 : index
      %c0_21 = arith.constant 0 : index
      %47 = vector.load %arg5[%c0_20, %c0_21] : memref<8x128xf32, #tpu.memory_space<vmem>>, vector<8x128xf32>
      tpu.vector_store %arg5[%c0_20, %c0_21], %46 {strides = array<i32>} : memref<8x128xf32, #tpu.memory_space<vmem>>, vector<8x128xf32>,
    } else {
    }
    %true = arith.constant true
    %37 = arith.xori %34, %true : i1
    %38 = arith.extui %37 : i1 to i32
    %c0_i32_14 = arith.constant 0 : i32
    %39 = arith.cmpi ne, %38, %c0_i32_14 : i32
    scf.if %39 {
      %43 = tpu.iota {dimensions = array<i32: 0>} : vector<16x128xi32>
      %44 = tpu.iota {dimensions = array<i32: 1>} : vector<16x128xi32>
      %c128_i32 = arith.constant 128 : i32
      %45 = vector.broadcast %c128_i32 : i32 to vector<16x128xi32>
      %46 = arith.muli %43, %45 : vector<16x128xi32>
      %47 = vector.broadcast %32 : i32 to vector<16x128xi32>
      %48 = arith.addi %47, %46 : vector<16x128xi32>
      %49 = arith.addi %48, %44 : vector<16x128xi32>
      %c2048_i32_17 = arith.constant 2048 : i32
      %50 = vector.broadcast %c2048_i32_17 : i32 to vector<16x128xi32>
      %51 = arith.cmpi slt, %49, %50 : vector<16x128xi32>
      %cst_18 = arith.constant 0.000000e+00 : f32
      %52 = vector.broadcast %cst_18 : f32 to vector<16x128xf32>
      %53 = arith.select %51, %29, %52 : vector<16x128xi1>, vector<16x128xf32>
      %c0_19 = arith.constant 0 : index
      %c0_20 = arith.constant 0 : index
      %54 = vector.load %arg5[%c0_19, %c0_20] : memref<8x128xf32, #tpu.memory_space<vmem>>, vector<8x128xf32>
      %55 = vector.shape_cast %53 : vector<16x128xf32> to vector<2x8x128xf32>
      %cst_21 = arith.constant dense<0.000000e+00> : vector<8x128xf32>
      %56 = vector.multi_reduction <add>, %55, %cst_21 [0] : vector<2x8x128xf32> to vector<8x128xf32>
      %57 = arith.addf %54, %56 : vector<8x128xf32>
      %c0_22 = arith.constant 0 : index
      %c0_23 = arith.constant 0 : index
      %58 = vector.load %arg5[%c0_22, %c0_23] : memref<8x128xf32, #tpu.memory_space<vmem>>, vector<8x128xf32>
      tpu.vector_store %arg5[%c0_22, %c0_23], %57 {strides = array<i32>} : memref<8x128xf32, #tpu.memory_space<vmem>>, vector<8x128xf32>,
    } else {
    }
    %c0_i32_15 = arith.constant 0 : i32
    %40 = arith.cmpi eq, %arg1, %c0_i32_15 : i32
    %41 = arith.extui %40 : i1 to i32
    %c0_i32_16 = arith.constant 0 : i32
    %42 = arith.cmpi ne, %41, %c0_i32_16 : i32
    scf.if %42 {
      %c0_17 = arith.constant 0 : index
      %c0_18 = arith.constant 0 : index
      %43 = vector.load %arg5[%c0_17, %c0_18] : memref<8x128xf32, #tpu.memory_space<vmem>>, vector<8x128xf32>
      %c0_19 = arith.constant 0 : index
      %c0_20 = arith.constant 0 : index
      %44 = vector.load %arg4[%c0_19, %c0_20] : memref<8x128xf32, #tpu.memory_space<vmem>>, vector<8x128xf32>
      tpu.vector_store %arg4[%c0_19, %c0_20], %43 {strides = array<i32>} : memref<8x128xf32, #tpu.memory_space<vmem>>, vector<8x128xf32>,
    } else {
    }
    return
  }
  func.func @transform_0(%arg0: i32, %arg1: i32) -> (i32, i32) {
    %c1_i32 = arith.constant 1 : i32
    %0 = arith.muli %arg0, %c1_i32 : i32
    %1 = arith.addi %0, %arg1 : i32
    %c0_i32 = arith.constant 0 : i32
    %2 = arith.minsi %1, %c0_i32 : i32
    %c0_i32_0 = arith.constant 0 : i32
    %c0_i32_1 = arith.constant 0 : i32
    return %2, %c0_i32_0 : i32, i32
  }
  func.func @transform_1(%arg0: i32, %arg1: i32) -> (i32, i32) {
    %c1_i32 = arith.constant 1 : i32
    %0 = arith.muli %arg0, %c1_i32 : i32
    %1 = arith.addi %0, %arg1 : i32
    %c0_i32 = arith.constant 0 : i32
    %2 = arith.minsi %1, %c0_i32 : i32
    %c0_i32_0 = arith.constant 0 : i32
    %c0_i32_1 = arith.constant 0 : i32
    return %2, %c0_i32_0 : i32, i32
  }
  func.func @transform_2(%arg0: i32, %arg1: i32) -> (i32, i32) {
    %c0_i32 = arith.constant 0 : i32
    %c0_i32_0 = arith.constant 0 : i32
    return %arg0, %c0_i32 : i32, i32
  }
}

</mosaic_0001>

<llo_original>
// kernel: tpu_custom_call.1
$region0: #{tpu_custom_call.1}
  #allocation0 [shape = 'u32[]', space=smem, size = 0x4, offset = 0x4, fixed_abs, tag = 'smem constant byte address 0x4 - core index']
  #allocation1 [shape = 'u32[144,128]{1,0:T(1,128)}', space=vmem, size = 0x12000, scoped, tag = 'internal scratch']
  #allocation2 [shape = 'f32[8,128]{1,0:T(8,128)}', space=vmem, size = 0x1000, scoped, tag = 'scratch operand']
  %s0 = inlined_call_operand.hbm [shape: f32[16,128], index: 0, kind: input, shape index: {}]
  %s1 = inlined_call_operand.hbm [shape: f32[16,128], index: 1, kind: input, shape index: {}]
  %s2 = inlined_call_operand.hbm [shape: f32[8,128], index: 2, kind: output, shape index: {}]
  %s3 = sld [smem:[#allocation0]]
  $region42: #{tpu_custom_call.1} parent=0
    _
  %s5 = ssub.s32 1, %s3
  %s6 = scalar_select 0, %s5, %s3
  $region1: #{tpu_custom_call.1} parent=0
    #allocation3 [shape = 'u8[8192]{0}', space=vmem, size = 0x2000, scoped, tag = 'input window, operand 0, single buffered']
    #allocation4 [shape = 's32[1]{0}', space=sflag, size = 0x4, scoped, tag = 'scoped memory for tpu_custom_call.1']
    #allocation5 [shape = 's32[1]{0}', space=sflag, size = 0x4, scoped, tag = 'scoped memory for tpu_custom_call.1']
    #allocation6 [shape = 'u8[8192]{0}', space=vmem, size = 0x2000, scoped, tag = 'input window, operand 1, single buffered']
    #allocation7 [shape = 's32[1]{0}', space=sflag, size = 0x4, scoped, tag = 'scoped memory for tpu_custom_call.1']
    #allocation8 [shape = 'u8[4096]{0}', space=vmem, size = 0x1000, scoped, tag = 'output window, operand 0, single buffered']
    %7 = vsyncpa [#allocation4], 0
    %8 = vsyncpa [#allocation7], 0
    %9 = vsyncpa [#allocation5], 0
    // Predicated region
    $region2: #{tpu_custom_call.1} parent=1 // pred_check
      _
    $region3: #{tpu_custom_call.1} parent=1 // pred_check_branch
      %11 = sbr.rel (0) target = $region5
    $region4: #{tpu_custom_call.1} parent=1 // pred_region
      %s12 = sadd.s32 0, 0
      %p13 = scmp.lt.s32.totalorder %s12, 0
      %s14 = scalar_select %p13, %s12, 0
      %s15 = smul.u32 2, %s14
      %s17 = ssub.s32 256, 256
      %18 = vsyncadd [#allocation4], %s17
      %s19 = smul.addr %s15, 128
      %s20 = scalar_lea.hbm %s0, %s19
      %s21 = sshll.u32 [#allocation3], 4
      %s22 = int_to_ptr.vmem [resolvable:$true] %s21
      %27 = dma.hbm_to_vmem [thread:$0]  %s20, 256, %s22, [#allocation4], 128, 128, 8
    $region5: #{tpu_custom_call.1} parent=1 // pred_fallthru
      _
    // Predicated region
    $region6: #{tpu_custom_call.1} parent=1 // pred_check
      _
    $region7: #{tpu_custom_call.1} parent=1 // pred_check_branch
      %29 = sbr.rel (0) target = $region9
    $region8: #{tpu_custom_call.1} parent=1 // pred_region
      %s30 = sadd.s32 0, 0
      %p31 = scmp.lt.s32.totalorder %s30, 0
      %s32 = scalar_select %p31, %s30, 0
      %s33 = smul.u32 2, %s32
      %s35 = ssub.s32 256, 256
      %36 = vsyncadd [#allocation7], %s35
      %s37 = smul.addr %s33, 128
      %s38 = scalar_lea.hbm %s1, %s37
      %s39 = sshll.u32 [#allocation6], 4
      %s40 = int_to_ptr.vmem [resolvable:$true] %s39
      %45 = dma.hbm_to_vmem [thread:$0]  %s38, 256, %s40, [#allocation7], 128, 128, 8
    $region9: #{tpu_custom_call.1} parent=1 // pred_fallthru
      _
    // Predicated region
    $region10: #{tpu_custom_call.1} parent=1 // pred_check
      _
    $region11: #{tpu_custom_call.1} parent=1 // pred_check_branch
      %47 = sbr.rel (0) target = $region13
    $region12: #{tpu_custom_call.1} parent=1 // pred_region
      %48 = dma.done [#allocation4], 256
    $region13: #{tpu_custom_call.1} parent=1 // pred_fallthru
      _
    // Predicated region
    $region14: #{tpu_custom_call.1} parent=1 // pred_check
      _
    $region15: #{tpu_custom_call.1} parent=1 // pred_check_branch
      %50 = sbr.rel (0) target = $region17
    $region16: #{tpu_custom_call.1} parent=1 // pred_region
      %51 = dma.done [#allocation7], 256
    $region17: #{tpu_custom_call.1} parent=1 // pred_fallthru
      _
    %s52 = sadd.s32 0, 0
    %p53 = scmp.lt.s32.totalorder %s52, 0
    %s54 = scalar_select %p53, %s52, 0
    %s55 = smul.u32 2, %s54
    %s56 = sadd.s32 0, 0
    %p57 = scmp.lt.s32.totalorder %s56, 0
    %s58 = scalar_select %p57, %s56, 0
    %s59 = smul.u32 2, %s58
    %p60 = scmp.eq.s32.totalorder 0, 0
    // Predicated region
    $region18: #{tpu_custom_call.1} parent=1 // pred_check
      %p61 = pneg %p60
    $region19: #{tpu_custom_call.1} parent=1 // pred_check_branch
      %63 = sbr.rel (%p61) target = $region21
    $region20: #{tpu_custom_call.1} parent=1 // pred_region
      %64 = vst [vmem:[#allocation2] sm:$0xff] 0.0
    $region21: #{tpu_custom_call.1} parent=1 // pred_fallthru
      _
    %v65 = vld [vmem:[#allocation3] sm:$0xff]
    %v66 = vld [vmem:[#allocation3 + $0x8] sm:$0xff]
    %v67 = vld [vmem:[#allocation6] sm:$0xff]
    %v68 = vld [vmem:[#allocation6 + $0x8] sm:$0xff]
    %v69 = vand.u32 2147483647, %v65
    %v70 = vand.u32 2147483647, %v66
    %v71 = vsub.f32 0.0, %v69
    %v72 = vsub.f32 0.0, %v70
    %v73 = vmul.f32 %v71, 1.442695
    %v74 = vpow.pop %v73
    %v75 = vmul.f32 %v72, 1.442695
    %v76 = vpow.pop %v75
    %v77 = vmax.f32 %v65, 0.0
    %v78 = vmax.f32 %v66, 0.0
    %v79 = vmul.f32 %v65, %v67
    %v80 = vmul.f32 %v66, %v68
    %v81 = vsub.f32 %v77, %v79
    %v82 = vsub.f32 %v78, %v80
    %v83 = vadd.f32 %v74, 1.0
    %v84 = vlog2.pop %v83
    %v85 = vmul.f32 %v84, 0.6931472
    %v86 = vmul.f32 -0.5, %v74
    %v87 = vadd.f32 %v86, 1.0
    %v88 = vmul.f32 %v87, %v74
    %v89 = vand.u32 2147483647, %v74
    %vm90 = vcmp.lt.f32.partialorder %v89, 0.0004427343
    %v91 = vsel %vm90, %v88, %v85
    %v92 = vadd.f32 %v76, 1.0
    %v93 = vlog2.pop %v92
    %v94 = vmul.f32 %v93, 0.6931472
    %v95 = vmul.f32 -0.5, %v76
    %v96 = vadd.f32 %v95, 1.0
    %v97 = vmul.f32 %v96, %v76
    %v98 = vand.u32 2147483647, %v76
    %vm99 = vcmp.lt.f32.partialorder %v98, 0.0004427343
    %v100 = vsel %vm99, %v97, %v94
    %v101 = vadd.f32 %v81, %v91
    %v102 = vadd.f32 %v82, %v100
    %v103 = vadd.f32 %v74, 1.0
    %v104 = vadd.f32 %v76, 1.0
    %v105 = vrcp.pop %v103
    %v106 = vmul.f32 1.0, %v105
    %v107 = vrcp.pop %v104
    %v108 = vmul.f32 1.0, %v107
    %vm109 = vcmp.ge.f32.partialorder %v65, 0.0
    %vm110 = vcmp.ge.f32.partialorder %v66, 0.0
    %vm111 = vcmp.eq.f32.partialorder %v67, 1.0
    %vm112 = vcmp.eq.f32.partialorder %v68, 1.0
    %vm113 = vmxor %vm109, %vm111
    %vm114 = vmxor %vm110, %vm112
    %vm115 = vmxor %vm113, 1
    %vm116 = vmxor %vm114, 1
    %v117 = vsub.f32 1.0, %v106
    %v118 = vsub.f32 1.0, %v108
    %v119 = vsel %vm115, %v117, %v106
    %v120 = vsel %vm116, %v118, %v108
    %v121 = vmul.f32 %v119, %v119
    %v122 = vmul.f32 %v120, %v120
    %v123 = vmul.f32 %v121, %v101
    %v124 = vmul.f32 %v122, %v102
    %s125 = sadd.s32 0, 0
    %s126 = smul.u32 %s125, 2048
    %s127 = sadd.s32 %s126, 2048
    %p128 = scmp.le.s32.totalorder %s127, 2048
    // Predicated region
    $region22: #{tpu_custom_call.1} parent=1 // pred_check
      %p129 = pneg %p128
    $region23: #{tpu_custom_call.1} parent=1 // pred_check_branch
      %131 = sbr.rel (%p129) target = $region25
    $region24: #{tpu_custom_call.1} parent=1 // pred_region
      %v132 = vld [vmem:[#allocation2] sm:$0xff]
      %v133 = vadd.f32 %v123, %v124
      %v134 = vadd.f32 %v132, %v133
      %135 = vst [vmem:[#allocation2] sm:$0xff] %v134
    $region25: #{tpu_custom_call.1} parent=1 // pred_fallthru
      _
    %p136 = scmp.gt.s32.totalorder %s127, 2048
    // Predicated region
    $region26: #{tpu_custom_call.1} parent=1 // pred_check
      %p137 = pneg %p136
    $region27: #{tpu_custom_call.1} parent=1 // pred_check_branch
      %139 = sbr.rel (%p137) target = $region29
    $region28: #{tpu_custom_call.1} parent=1 // pred_region
      %v140 = vlaneseq
      %v141 = vshrl.u32 %v140, 7
      %v142 = vadd.s32 %v141, 8
      %v143 = vlaneseq
      %v144 = vand.u32 %v143, 127
      %v145 = vmul.u32 %v141, 128
      %v146 = vmul.u32 %v142, 128
      %v147 = vstv %s126
      %v148 = vadd.s32 %v147, %v145
      %v149 = vadd.s32 %v147, %v146
      %v150 = vadd.s32 %v148, %v144
      %v151 = vadd.s32 %v149, %v144
      %vm152 = vcmp.lt.s32.totalorder %v150, 2048
      %vm153 = vcmp.lt.s32.totalorder %v151, 2048
      %v154 = vsel %vm152, %v123, 0.0
      %v155 = vsel %vm153, %v124, 0.0
      %v156 = vld [vmem:[#allocation2] sm:$0xff]
      %v157 = vadd.f32 %v154, %v155
      %v158 = vadd.f32 %v156, %v157
      %159 = vst [vmem:[#allocation2] sm:$0xff] %v158
    $region29: #{tpu_custom_call.1} parent=1 // pred_fallthru
      _
    // Predicated region
    $region30: #{tpu_custom_call.1} parent=1 // pred_check
      %p160 = pneg %p60
    $region31: #{tpu_custom_call.1} parent=1 // pred_check_branch
      %162 = sbr.rel (%p160) target = $region33
    $region32: #{tpu_custom_call.1} parent=1 // pred_region
      %v163 = vld [vmem:[#allocation2] sm:$0xff]
      %164 = vst [vmem:[#allocation8] sm:$0xff] %v163
    $region33: #{tpu_custom_call.1} parent=1 // pred_fallthru
      _
    // Predicated region
    $region34: #{tpu_custom_call.1} parent=1 // pred_check
      _
    $region35: #{tpu_custom_call.1} parent=1 // pred_check_branch
      %166 = sbr.rel (0) target = $region37
    $region36: #{tpu_custom_call.1} parent=1 // pred_region
      %s168 = ssub.s32 128, 128
      %169 = vsyncadd [#allocation5], %s168
      %s171 = sshll.u32 [#allocation8], 4
      %s172 = int_to_ptr.vmem [resolvable:$true] %s171
      %174 = dma.vmem_to_hbm [thread:$0]  %s172, 128, %s2, [#allocation5]
    $region37: #{tpu_custom_call.1} parent=1 // pred_fallthru
      _
    // Predicated region
    $region38: #{tpu_custom_call.1} parent=1 // pred_check
      _
    $region39: #{tpu_custom_call.1} parent=1 // pred_check_branch
      %176 = sbr.rel (0) target = $region41
    $region40: #{tpu_custom_call.1} parent=1 // pred_region
      %177 = dma.done [#allocation5], 128
    $region41: #{tpu_custom_call.1} parent=1 // pred_fallthru
      _
    %178 = vsyncpa [#allocation4], 1
    %179 = vsyncpa [#allocation7], 1
    %180 = vsyncpa [#allocation5], 1

</llo_original>
